<compile_context>
chip_gen: v5e
topology: v5e:2x2
jax: 0.10.0
libtpu: 0.0.40
codegen_flags: <defaults>
</compile_context>

<pallas_src>
import functools

import jax
import jax.numpy as jnp
from jax import lax
from jax.experimental import pallas as pl
from jax.experimental.pallas import tpu as pltpu


def _round_up(v, m):
    return (v + m - 1) // m * m


# ---------------------------------------------------------------------------
# Kernel 1: MLP + column-sum of the combination weights (runs once, un-tiled).
# The batch coupling of the original module (sum over k of weights[k, i]) makes
# this a global reduction, so it cannot live inside the batch-tiled kernel.
# ---------------------------------------------------------------------------
def _mlp_colsum_kernel(num_layers, apply_softmax, *refs):
    x_ref = refs[0]
    wb_refs = refs[1:1 + 2 * num_layers]
    colsum_ref = refs[1 + 2 * num_layers]

    h = x_ref[...].astype(jnp.float32)
    for l in range(num_layers):
        w = wb_refs[2 * l][...]
        b = wb_refs[2 * l + 1][...]
        h = jnp.dot(h, w, preferred_element_type=jnp.float32) + b
        if l < num_layers - 1:
            h = jnp.maximum(h, 0.0)                       # nn.ReLU
    if apply_softmax:                                     # nn.Softmax (last dim)
        m = jnp.max(h, axis=-1, keepdims=True)
        e = jnp.exp(h - m)
        h = e / jnp.sum(e, axis=-1, keepdims=True)
    # combined = sum_i (sum_k weights[k,i]) * list_inputs[i]  -> only column sums needed
    colsum_ref[...] = jnp.sum(h, axis=0, keepdims=True)   # (1, E)


# ---------------------------------------------------------------------------
# Kernel 2: expert combination + exact newsvendor solve, tiled over the batch.
# ---------------------------------------------------------------------------
def _newsvendor_kernel(num_experts, critical_fractile, gamma, n_bisect,
                       colsum_ref, p_ref, y_ref,
                       z_ref, pinball_ref, err_ref, werr_ref):
    cf = critical_fractile
    y = y_ref[...].astype(jnp.float32)                    # (1, S_pad)

    # ---- combined probability vector for this batch tile: p = sum_e c[e] * P[e] ----
    # colsum lives in SMEM -> cheap scalar reads, no cross-lane extraction.
    p = colsum_ref[0] * p_ref[0].astype(jnp.float32)      # (TB, S_pad)
    for e in range(1, num_experts):
        p = p + colsum_ref[e] * p_ref[e].astype(jnp.float32)

    # ---- z-independent moments (hoisted out of the bisection loop) ----
    p_sq = p * p
    psum = jnp.sum(p, axis=-1, keepdims=True)             # (TB, 1)
    s0 = jnp.sum(p_sq, axis=-1, keepdims=True)
    pqy = p_sq * y
    s1 = jnp.sum(pqy, axis=-1, keepdims=True)
    s2 = jnp.sum(pqy * y, axis=-1, keepdims=True)
    g_base = (1.0 - cf) * psum                             # loop-invariant pinball part

    # Subgradient of  p @ pinball(y - z) + gamma * ||p * (y - z)||_2  at z:
    #   pinball term: (1-cf)*sum(p) - sum_{y > z} p        (one masked lane reduce)
    #   norm term   : (z*S0 - S1) * rsqrt(S2 - 2 z S1 + z^2 S0)   (closed form, EUP)
    def subgrad(z):
        tail = jnp.sum(jnp.where(y > z, p, 0.0), axis=-1, keepdims=True)
        numer = z * s0 - s1
        nrm2 = jnp.maximum(s2 - z * s1 + z * numer, 1e-24)   # == S2 - 2 z S1 + z^2 S0
        return (g_base - tail) + gamma * numer * lax.rsqrt(nrm2)

    def body(_, carry):
        lo, hi = carry
        mid = 0.5 * (lo + hi)
        go_right = subgrad(mid) < 0.0
        return jnp.where(go_right, mid, lo), jnp.where(go_right, hi, mid)

    tb = p.shape[0]
    lo0 = jnp.zeros((tb, 1), jnp.float32)
    hi0 = jnp.ones((tb, 1), jnp.float32)
    # TODO(synk): bisection assumes combined weights p >= 0 (convex program, as the
    #             CvxpyLayer requires); forward-only, no implicit-function VJP.
    lo, hi = lax.fori_loop(0, n_bisect, body, (lo0, hi0), unroll=2)
    z = 0.5 * (lo + hi)                                   # (TB, 1), z in [0, 1]

    err = y - z                                           # (TB, S_pad)
    pinball = jnp.maximum(cf * err, (cf - 1.0) * err)
    z_ref[...] = jnp.broadcast_to(z, z_ref.shape)         # lane-dense (TB, 128) store
    pinball_ref[...] = pinball
    err_ref[...] = err
    werr_ref[...] = p * err


# ---------------------------------------------------------------------------
# Wrapper
# ---------------------------------------------------------------------------
def adaptive_comb_newsvendor_forward(x, list_inputs, mlp_params, y_supp,
                                     critical_fractile, gamma,
                                     apply_softmax=False, n_bisect=30,
                                     block_batch=256, p_dtype=jnp.float32):
    """Forward pass of AdaptiveCombNewsvendorLayer. Returns (z, pinball, error, w_error)."""
    x = jnp.asarray(x, jnp.float32)
    B = x.shape[0]
    y1 = jnp.asarray(y_supp, jnp.float32).reshape(-1)
    S = y1.shape[0]
    E = len(list_inputs)
    num_layers = len(mlp_params)

    flat_params = []
    for w, b in mlp_params:
        flat_params.append(jnp.asarray(w, jnp.float32))                 # (in, out)
        flat_params.append(jnp.asarray(b, jnp.float32).reshape(1, -1))  # (1, out)

    # ---- Kernel 1: global combination-weight column sums ----
    vmem = pl.BlockSpec(memory_space=pltpu.MemorySpace.VMEM)
    colsum2d = pl.pallas_call(
        functools.partial(_mlp_colsum_kernel, num_layers, bool(apply_softmax)),
        out_shape=jax.ShapeDtypeStruct((1, E), jnp.float32),
        in_specs=[vmem] * (1 + 2 * num_layers),
        out_specs=vmem,
    )(x, *flat_params)
    colsum = colsum2d.reshape(E)

    # ---- Pad to TPU-friendly shapes: lanes (S) -> x128, batch -> tile multiple ----
    S_pad = _round_up(S, 128)
    TB = min(_round_up(block_batch, 8), _round_up(B, 8))
    B_pad = _round_up(B, TB)

    P = jnp.stack([jnp.asarray(p) for p in list_inputs], axis=0).astype(p_dtype)  # (E,B,S)
    P = jnp.pad(P, ((0, 0), (0, B_pad - B), (0, S_pad - S)))
    y2 = jnp.pad(y1.reshape(1, S), ((0, 0), (0, S_pad - S)))

    grid = (B_pad // TB,)

    p_block_bytes = E * TB * S_pad * jnp.dtype(p_dtype).itemsize
    out_block_bytes = (3 * TB * S_pad + TB * 128) * 4
    vmem_limit = int(min(max(2 * (p_block_bytes + out_block_bytes)
                             + 8 * TB * S_pad * 4, 16 * 2 ** 20), 48 * 2 ** 20))

    cost = pl.CostEstimate(
        flops=int((2 * E + 5 * n_bisect + 10) * B_pad * S_pad),
        transcendentals=int(n_bisect * B_pad),
        bytes_accessed=int(E * B_pad * S_pad * jnp.dtype(p_dtype).itemsize
                           + (3 * B_pad * S_pad + B_pad * 128 + S_pad + E) * 4),
    )

    kernel = functools.partial(_newsvendor_kernel, E, float(critical_fractile),
                               float(gamma), int(n_bisect))

    z_full, pin_full, err_full, werr_full = pl.pallas_call(
        kernel,
        grid=grid,
        in_specs=[
            pl.BlockSpec(memory_space=pltpu.MemorySpace.SMEM),      # colsum (E,) scalars
            pl.BlockSpec((E, TB, S_pad), lambda i: (0, i, 0)),      # P batch tile
            pl.BlockSpec((1, S_pad), lambda i: (0, 0)),             # y_supp (resident)
        ],
        out_specs=(
            pl.BlockSpec((TB, 128), lambda i: (i, 0)),              # z (lane-dense slab)
            pl.BlockSpec((TB, S_pad), lambda i: (i, 0)),            # pinball
            pl.BlockSpec((TB, S_pad), lambda i: (i, 0)),            # error
            pl.BlockSpec((TB, S_pad), lambda i: (i, 0)),            # w_error
        ),
        out_shape=(
            jax.ShapeDtypeStruct((B_pad, 128), jnp.float32),
            jax.ShapeDtypeStruct((B_pad, S_pad), jnp.float32),
            jax.ShapeDtypeStruct((B_pad, S_pad), jnp.float32),
            jax.ShapeDtypeStruct((B_pad, S_pad), jnp.float32),
        ),
        compiler_params=pltpu.CompilerParams(
            dimension_semantics=("parallel",),
            vmem_limit_bytes=vmem_limit,
        ),
        cost_estimate=cost,
    )(colsum, P, y2)

    return (z_full[:B, :1], pin_full[:B, :S],
            err_full[:B, :S], werr_full[:B, :S])


# ---------------------------------------------------------------------------
# Self-test
# ---------------------------------------------------------------------------
def _reference_combined(x, list_inputs, mlp_params, apply_softmax):
    """Pure-JAX reference for the MLP + batch-coupled combination."""
    h = x
    n = len(mlp_params)
    for l, (w, b) in enumerate(mlp_params):
        h = jnp.dot(h, w, precision=lax.Precision.HIGHEST) + b
        if l < n - 1:
            h = jnp.maximum(h, 0.0)
    if apply_softmax:
        h = jax.nn.softmax(h, axis=-1)
    colsum = jnp.sum(h, axis=0)                              # (E,)
    return jnp.einsum('e,ebs->bs', colsum, jnp.stack(list_inputs, axis=0))


def _make_case(key, B, input_size, S, E, hidden_sizes):
    sizes = [input_size] + hidden_sizes + [E]
    params = []
    for i in range(len(sizes) - 1):
        key, kw, kb = jax.random.split(key, 3)
        bound = 1.0 / (sizes[i] ** 0.5)
        w = jax.random.uniform(kw, (sizes[i], sizes[i + 1]), jnp.float32, -bound, bound)
        b = jax.random.uniform(kb, (sizes[i + 1],), jnp.float32, -bound, bound)
        params.append((w, b))
    key, kx = jax.random.split(key)
    x = jax.random.normal(kx, (B, input_size), jnp.float32)
    list_inputs = []
    for _ in range(E):
        key, kp = jax.random.split(key)
        logits = jax.random.normal(kp, (B, S), jnp.float32)
        list_inputs.append(jax.nn.softmax(logits, axis=-1))
    return key, x, list_inputs, params


def _check_case(x, list_inputs, params, y_supp, cf, gamma, **kw):
    z, pinball, error, w_error = adaptive_comb_newsvendor_forward(
        x, list_inputs, params, y_supp, cf, gamma, **kw)
    jax.block_until_ready((z, pinball, error, w_error))

    B, S = list_inputs[0].shape
    assert z.shape == (B, 1) and pinball.shape == (B, S)
    assert error.shape == (B, S) and w_error.shape == (B, S)
    assert bool(jnp.all(jnp.isfinite(z)))
    assert bool(jnp.all((z >= 0.0) & (z <= 1.0)))

    # Cross-check against a pure-JAX reference of the same convex program.
    p = _reference_combined(x, list_inputs, params, kw.get("apply_softmax", False))
    errk = y_supp[None, :] - z
    assert bool(jnp.allclose(error, errk, atol=1e-5))
    assert bool(jnp.allclose(pinball, jnp.maximum(cf * errk, (cf - 1.0) * errk), atol=1e-5))
    assert bool(jnp.allclose(w_error, p * errk, atol=2e-3))

    pink = jnp.maximum(cf * errk, (cf - 1.0) * errk)
    f_k = jnp.sum(pink * p, axis=-1) + gamma * jnp.linalg.norm(p * errk, axis=-1)
    zg = jnp.linspace(0.0, 1.0, 4097)[:, None]               # (G, 1)
    eg = y_supp[None, :] - zg                                 # (G, S)
    pg = jnp.maximum(cf * eg, (cf - 1.0) * eg)                # (G, S)
    f_g = pg @ p.T + gamma * jnp.sqrt((eg ** 2) @ (p ** 2).T)  # (G, B)
    assert bool(jnp.all(f_k <= f_g.min(axis=0) + 1e-3))       # kernel z is (near-)optimal


if __name__ == "__main__":
    key = jax.random.PRNGKey(0)
    critical_fractile = 0.8
    gamma = 0.1

    # Case 1: small shapes consistent with the module (single grid step).
    B, input_size, S, E = 2, 8, 24, 4
    y_supp = jnp.linspace(0.0, 1.0, S, dtype=jnp.float32)
    key, x, list_inputs, params = _make_case(key, B, input_size, S, E, [32, 16])
    _check_case(x, list_inputs, params, y_supp, critical_fractile, gamma,
                apply_softmax=True)

    # Case 2: exercises the batch grid (3 tiles) + batch/support padding paths.
    B2, input_size2, S2, E2 = 20, 6, 24, 5
    y_supp2 = jnp.linspace(0.0, 1.0, S2, dtype=jnp.float32)
    key, x2, list_inputs2, params2 = _make_case(key, B2, input_size2, S2, E2, [16])
    _check_case(x2, list_inputs2, params2, y_supp2, critical_fractile, gamma,
                apply_softmax=True, block_batch=8)

    print("KERNEL_OK")
</pallas_src>

<mosaic_0001>
module attributes {stable_mosaic.version = 11 : i64} {
  func.func @_mlp_colsum_kernel(%arg0: memref<2x8xf32, #tpu.memory_space<vmem>>, %arg1: memref<8x32xf32, #tpu.memory_space<vmem>>, %arg2: memref<1x32xf32, #tpu.memory_space<vmem>>, %arg3: memref<32x16xf32, #tpu.memory_space<vmem>>, %arg4: memref<1x16xf32, #tpu.memory_space<vmem>>, %arg5: memref<16x4xf32, #tpu.memory_space<vmem>>, %arg6: memref<1x4xf32, #tpu.memory_space<vmem>>, %arg7: memref<1x4xf32, #tpu.memory_space<vmem>>) attributes {dimension_semantics = [], scalar_prefetch = 0 : i64, scratch_operands = 0 : i64, tpu.core_type = #tpu.core_type<tc>} {
    %c0 = arith.constant 0 : index
    %c0_0 = arith.constant 0 : index
    %0 = vector.load %arg0[%c0, %c0_0] : memref<2x8xf32, #tpu.memory_space<vmem>>, vector<2x8xf32>
    %c0_1 = arith.constant 0 : index
    %c0_2 = arith.constant 0 : index
    %1 = vector.load %arg1[%c0_1, %c0_2] : memref<8x32xf32, #tpu.memory_space<vmem>>, vector<8x32xf32>
    %c0_3 = arith.constant 0 : index
    %c0_4 = arith.constant 0 : index
    %2 = vector.load %arg2[%c0_3, %c0_4] : memref<1x32xf32, #tpu.memory_space<vmem>>, vector<1x32xf32>
    %cst = arith.constant dense<0.000000e+00> : vector<2x32xf32>
    %3 = tpu.matmul %0, %1, %cst {dimension_numbers = #tpu.dot_dimension_numbers<[1], [0], [0], [1], [0, 0, 1, 1], [], []>} : vector<2x8xf32>, vector<8x32xf32>, vector<2x32xf32> -> vector<2x32xf32>
    %4 = vector.broadcast %2 : vector<1x32xf32> to vector<2x32xf32>
    %5 = arith.addf %3, %4 : vector<2x32xf32>
    %cst_5 = arith.constant 0.000000e+00 : f32
    %6 = vector.broadcast %cst_5 : f32 to vector<2x32xf32>
    %7 = arith.maximumf %5, %6 : vector<2x32xf32>
    %c0_6 = arith.constant 0 : index
    %c0_7 = arith.constant 0 : index
    %8 = vector.load %arg3[%c0_6, %c0_7] : memref<32x16xf32, #tpu.memory_space<vmem>>, vector<32x16xf32>
    %c0_8 = arith.constant 0 : index
    %c0_9 = arith.constant 0 : index
    %9 = vector.load %arg4[%c0_8, %c0_9] : memref<1x16xf32, #tpu.memory_space<vmem>>, vector<1x16xf32>
    %cst_10 = arith.constant dense<0.000000e+00> : vector<2x16xf32>
    %10 = tpu.matmul %7, %8, %cst_10 {dimension_numbers = #tpu.dot_dimension_numbers<[1], [0], [0], [1], [0, 0, 1, 1], [], []>} : vector<2x32xf32>, vector<32x16xf32>, vector<2x16xf32> -> vector<2x16xf32>
    %11 = vector.broadcast %9 : vector<1x16xf32> to vector<2x16xf32>
    %12 = arith.addf %10, %11 : vector<2x16xf32>
    %cst_11 = arith.constant 0.000000e+00 : f32
    %13 = vector.broadcast %cst_11 : f32 to vector<2x16xf32>
    %14 = arith.maximumf %12, %13 : vector<2x16xf32>
    %c0_12 = arith.constant 0 : index
    %c0_13 = arith.constant 0 : index
    %15 = vector.load %arg5[%c0_12, %c0_13] : memref<16x4xf32, #tpu.memory_space<vmem>>, vector<16x4xf32>
    %c0_14 = arith.constant 0 : index
    %c0_15 = arith.constant 0 : index
    %16 = vector.load %arg6[%c0_14, %c0_15] : memref<1x4xf32, #tpu.memory_space<vmem>>, vector<1x4xf32>
    %cst_16 = arith.constant dense<0.000000e+00> : vector<2x4xf32>
    %17 = tpu.matmul %14, %15, %cst_16 {dimension_numbers = #tpu.dot_dimension_numbers<[1], [0], [0], [1], [0, 0, 1, 1], [], []>} : vector<2x16xf32>, vector<16x4xf32>, vector<2x4xf32> -> vector<2x4xf32>
    %18 = vector.broadcast %16 : vector<1x4xf32> to vector<2x4xf32>
    %19 = arith.addf %17, %18 : vector<2x4xf32>
    %cst_17 = arith.constant dense<0xFF800000> : vector<2xf32>
    %20 = vector.multi_reduction <maximumf>, %19, %cst_17 [1] : vector<2x4xf32> to vector<2xf32>
    %21 = vector.shape_cast %20 : vector<2xf32> to vector<2x1xf32>
    %22 = vector.broadcast %21 : vector<2x1xf32> to vector<2x4xf32>
    %23 = arith.subf %19, %22 : vector<2x4xf32>
    %24 = math.exp %23 : vector<2x4xf32>
    %cst_18 = arith.constant dense<0.000000e+00> : vector<2xf32>
    %25 = vector.multi_reduction <add>, %24, %cst_18 [1] : vector<2x4xf32> to vector<2xf32>
    %26 = vector.shape_cast %25 : vector<2xf32> to vector<2x1xf32>
    %27 = vector.broadcast %26 : vector<2x1xf32> to vector<2x4xf32>
    %28 = arith.divf %24, %27 : vector<2x4xf32>
    %cst_19 = arith.constant dense<0.000000e+00> : vector<4xf32>
    %29 = vector.multi_reduction <add>, %28, %cst_19 [0] : vector<2x4xf32> to vector<4xf32>
    %30 = vector.shape_cast %29 : vector<4xf32> to vector<1x4xf32>
    %c0_20 = arith.constant 0 : index
    %c0_21 = arith.constant 0 : index
    %31 = vector.load %arg7[%c0_20, %c0_21] : memref<1x4xf32, #tpu.memory_space<vmem>>, vector<1x4xf32>
    tpu.vector_store %arg7[%c0_20, %c0_21], %30 {strides = array<i32>} : memref<1x4xf32, #tpu.memory_space<vmem>>, vector<1x4xf32>,
    return
  }
}

</mosaic_0001>

<llo_original>
// kernel: tpu_custom_call.1
$region0: #{tpu_custom_call.1}
  #allocation0 [shape = 'u32[]', space=smem, size = 0x4, offset = 0x4, fixed_abs, tag = 'smem constant byte address 0x4 - core index']
  #allocation1 [shape = 'u32[72,128]{1,0:T(1,128)}', space=vmem, size = 0x9000, scoped, tag = 'internal scratch']
  %s0 = inlined_call_operand.vmem [shape: f32[2,8], index: 0, kind: input, shape index: {}]
  %s1 = inlined_call_operand.vmem [shape: f32[8,32], index: 1, kind: input, shape index: {}]
  %s2 = inlined_call_operand.vmem [shape: f32[1,32], index: 2, kind: input, shape index: {}]
  %s3 = inlined_call_operand.vmem [shape: f32[32,16], index: 3, kind: input, shape index: {}]
  %s4 = inlined_call_operand.vmem [shape: f32[1,16], index: 4, kind: input, shape index: {}]
  %s5 = inlined_call_operand.vmem [shape: f32[16,4], index: 5, kind: input, shape index: {}]
  %s6 = inlined_call_operand.vmem [shape: f32[1,4], index: 6, kind: input, shape index: {}]
  %s7 = inlined_call_operand.hbm [shape: f32[1,4], index: 7, kind: output, shape index: {}]
  %s8 = sld [smem:[#allocation0]]
  $region38: #{tpu_custom_call.1} parent=0
    _
  %s10 = ssub.s32 1, %s8
  %s11 = scalar_select 0, %s10, %s8
  $region1: #{tpu_custom_call.1} parent=0
    #allocation2 [shape = 'u8[512]{0}', space=vmem, size = 0x400, scoped, tag = 'output window, operand 0, single buffered']
    #allocation3 [shape = 's32[1]{0}', space=sflag, size = 0x4, scoped, tag = 'scoped memory for tpu_custom_call.1']
    %12 = vsyncpa [#allocation3], 0
    // Predicated region
    $region2: #{tpu_custom_call.1} parent=1 // pred_check
      _
    $region3: #{tpu_custom_call.1} parent=1 // pred_check_branch
      %14 = sbr.rel (0) target = $region5
    $region4: #{tpu_custom_call.1} parent=1 // pred_region
      _
    $region5: #{tpu_custom_call.1} parent=1 // pred_fallthru
      _
    // Predicated region
    $region6: #{tpu_custom_call.1} parent=1 // pred_check
      _
    $region7: #{tpu_custom_call.1} parent=1 // pred_check_branch
      %16 = sbr.rel (0) target = $region9
    $region8: #{tpu_custom_call.1} parent=1 // pred_region
      _
    $region9: #{tpu_custom_call.1} parent=1 // pred_fallthru
      _
    // Predicated region
    $region10: #{tpu_custom_call.1} parent=1 // pred_check
      _
    $region11: #{tpu_custom_call.1} parent=1 // pred_check_branch
      %18 = sbr.rel (0) target = $region13
    $region12: #{tpu_custom_call.1} parent=1 // pred_region
      _
    $region13: #{tpu_custom_call.1} parent=1 // pred_fallthru
      _
    // Predicated region
    $region14: #{tpu_custom_call.1} parent=1 // pred_check
      _
    $region15: #{tpu_custom_call.1} parent=1 // pred_check_branch
      %20 = sbr.rel (0) target = $region17
    $region16: #{tpu_custom_call.1} parent=1 // pred_region
      _
    $region17: #{tpu_custom_call.1} parent=1 // pred_fallthru
      _
    // Predicated region
    $region18: #{tpu_custom_call.1} parent=1 // pred_check
      _
    $region19: #{tpu_custom_call.1} parent=1 // pred_check_branch
      %22 = sbr.rel (0) target = $region21
    $region20: #{tpu_custom_call.1} parent=1 // pred_region
      _
    $region21: #{tpu_custom_call.1} parent=1 // pred_fallthru
      _
    // Predicated region
    $region22: #{tpu_custom_call.1} parent=1 // pred_check
      _
    $region23: #{tpu_custom_call.1} parent=1 // pred_check_branch
      %24 = sbr.rel (0) target = $region25
    $region24: #{tpu_custom_call.1} parent=1 // pred_region
      _
    $region25: #{tpu_custom_call.1} parent=1 // pred_fallthru
      _
    // Predicated region
    $region26: #{tpu_custom_call.1} parent=1 // pred_check
      _
    $region27: #{tpu_custom_call.1} parent=1 // pred_check_branch
      %26 = sbr.rel (0) target = $region29
    $region28: #{tpu_custom_call.1} parent=1 // pred_region
      _
    $region29: #{tpu_custom_call.1} parent=1 // pred_fallthru
      _
    %v27 = vld [vmem:[%s0] sm:$0x3]
    %v28 = vld [vmem:[%s1] sm:$0xff]
    %v29 = vld [vmem:[%s2] sm:$0x1]
    %v31 = vperm.slane %v29, 0
    %vm33 = vcmask 64512
    %v35 = vsel %vm33, %v27, 0
    %37 = vmatpush.msra.mxu0 0.0
    %38 = vmatpush.msra.mxu0 0.0
    %39 = vmatpush.msra.mxu0 0.0
    %40 = vmatpush.msra.mxu0 0.0
    %41 = vmatpush.msra.mxu0 0.0
    %42 = vmatpush.msra.mxu0 0.0
    %43 = vmatpush.msra.mxu0 0.0
    %44 = vmatpush.msra.mxu0 0.0
    %45 = vmatpush.msra.mxu0 0.0
    %46 = vmatpush.msra.mxu0 0.0
    %47 = vmatpush.msra.mxu0 0.0
    %48 = vmatpush.msra.mxu0 0.0
    %49 = vmatpush.msra.mxu0 0.0
    %50 = vmatpush.msra.mxu0 0.0
    %51 = vmatpush.msra.mxu0 0.0
    %52 = vmatpush.msra.mxu0 %v28
    %53 = vmatmul.f32.gmra.mxu0 %v35
    %v54 = vpop.f32.mrf.mxu0
    %v55 = vadd.f32 %v31, %v54
    %56 = vdwg.mxu0
    %v57 = vmax.f32 %v55, 0.0
    %v58 = vld [vmem:[%s3] sm:$0xff]
    %v59 = vld [vmem:[%s3 + $0x8] sm:$0xff]
    %v60 = vld [vmem:[%s3 + $0x10] sm:$0xff]
    %v61 = vld [vmem:[%s3 + $0x18] sm:$0xff]
    %v62 = vld [vmem:[%s4] sm:$0x1]
    %v64 = vperm.slane %v62, 0
    %vm66 = vcmask 261120
    %v68 = vsel %vm66, %v57, 0
    %70 = vmatpush.msra.mxu0 0.0
    %71 = vmatpush.msra.mxu0 0.0
    %72 = vmatpush.msra.mxu0 0.0
    %73 = vmatpush.msra.mxu0 0.0
    %74 = vmatpush.msra.mxu0 0.0
    %75 = vmatpush.msra.mxu0 0.0
    %76 = vmatpush.msra.mxu0 0.0
    %77 = vmatpush.msra.mxu0 0.0
    %78 = vmatpush.msra.mxu0 0.0
    %79 = vmatpush.msra.mxu0 0.0
    %80 = vmatpush.msra.mxu0 0.0
    %81 = vmatpush.msra.mxu0 0.0
    %82 = vmatpush.msra.mxu0 %v61
    %83 = vmatpush.msra.mxu0 %v60
    %84 = vmatpush.msra.mxu0 %v59
    %85 = vmatpush.msra.mxu0 %v58
    %86 = vmatmul.f32.gmra.mxu0 %v68
    %v87 = vpop.f32.mrf.mxu0
    %v88 = vadd.f32 %v64, %v87
    %89 = vdwg.mxu0
    %v90 = vmax.f32 %v88, 0.0
    %v91 = vld [vmem:[%s5] sm:$0xff]
    %v92 = vld [vmem:[%s5 + $0x8] sm:$0xff]
    %v93 = vld [vmem:[%s6] sm:$0x1]
    %v95 = vperm.slane %v93, 0
    %vm97 = vcmask 130048
    %v99 = vsel %vm97, %v90, 0
    %101 = vmatpush.msra.mxu0 0.0
    %102 = vmatpush.msra.mxu0 0.0
    %103 = vmatpush.msra.mxu0 0.0
    %104 = vmatpush.msra.mxu0 0.0
    %105 = vmatpush.msra.mxu0 0.0
    %106 = vmatpush.msra.mxu0 0.0
    %107 = vmatpush.msra.mxu0 0.0
    %108 = vmatpush.msra.mxu0 0.0
    %109 = vmatpush.msra.mxu0 0.0
    %110 = vmatpush.msra.mxu0 0.0
    %111 = vmatpush.msra.mxu0 0.0
    %112 = vmatpush.msra.mxu0 0.0
    %113 = vmatpush.msra.mxu0 0.0
    %114 = vmatpush.msra.mxu0 0.0
    %115 = vmatpush.msra.mxu0 %v92
    %116 = vmatpush.msra.mxu0 %v91
    %117 = vmatmul.f32.gmra.mxu0 %v99
    %v118 = vpop.f32.mrf.mxu0
    %v119 = vadd.f32 %v95, %v118
    %120 = vdwg.mxu0
    %vm121 = vcmask 25600
    %v122 = vsel %vm121, %v119, -inf
    %123 = vmax.xlane.f32.xlu0 %v122
    %v124 = vpop.xlane.xlu0 %123
    %v125 = vsub.f32 %v119, %v124
    %v126 = vmul.f32 %v125, 1.442695
    %v127 = vpow.pop %v126
    %v128 = vsel %vm121, %v127, 0.0
    %129 = vadd.xlane.f32.xlu0 %v128
    %v130 = vpop.xlane.xlu0 %129
    %v131 = vrcp.pop %v130
    %v132 = vmul.f32 %v130, %v131
    %v133 = vsub.f32 1.0, %v132
    %v134 = vmul.f32 %v131, %v133
    %v135 = vadd.f32 %v131, %v134
    %vm136 = vweird.f32 %v130
    %vm137 = vweird.f32 %v131
    %vm138 = vmor %vm136, %vm137
    %v139 = vsel %vm138, %v131, %v135
    %v140 = vand.u32 2147483647, %v130
    %vm141 = vcmp.eq.f32.partialorder %v140, 8.507059e+37
    %v142 = vand.u32 %v130, 2147483648
    %v143 = vor.u32 1.1754944e-38, %v142
    %v144 = vsel %vm141, %v143, %v139
    %v145 = vmul.f32 %v127, %v144
    %v146 = vsel %vm121, %v145, 0.0
    %v147 = vrot.slane %v146, 4
    %v148 = vadd.f32 %v146, %v147
    %v149 = vrot.slane %v148, 2
    %v150 = vadd.f32 %v148, %v149
    %v151 = vrot.slane %v150, 1
    %v152 = vadd.f32 %v150, %v151
    %vm153 = vcmask 24576
    %154 = vst.msk [vmem:[#allocation2] sm:$0x1] %vm153, %v152
    // Predicated region
    $region30: #{tpu_custom_call.1} parent=1 // pred_check
      _
    $region31: #{tpu_custom_call.1} parent=1 // pred_check_branch
      %156 = sbr.rel (0) target = $region33
    $region32: #{tpu_custom_call.1} parent=1 // pred_region
      %158 = vsyncadd [#allocation3], 0
      %s160 = sshll.u32 [#allocation2], 4
      %s161 = int_to_ptr.vmem [resolvable:$true] %s160
      %s162 = sshll.u32 %s7, 4
      %s163 = int_to_ptr.hbm [resolvable:$true] %s162
      %165 = dma.vmem_to_hbm [thread:$0]  %s161, 16, %s163, [#allocation3]
    $region33: #{tpu_custom_call.1} parent=1 // pred_fallthru
      _
    // Predicated region
    $region34: #{tpu_custom_call.1} parent=1 // pred_check
      _
    $region35: #{tpu_custom_call.1} parent=1 // pred_check_branch
      %167 = sbr.rel (0) target = $region37
    $region36: #{tpu_custom_call.1} parent=1 // pred_region
      %169 = dma.done [#allocation3], 16
    $region37: #{tpu_custom_call.1} parent=1 // pred_fallthru
      _
    %170 = vsyncpa [#allocation3], 1

</llo_original>
